<compile_context>
chip_gen: v5e
topology: v5e:2x2
jax: 0.10.0
libtpu: 0.0.40
codegen_flags: <defaults>
</compile_context>

<pallas_src>
import jax
import jax.numpy as jnp
from jax import lax
from jax.experimental import pallas as pl
from jax.experimental.pallas import tpu as pltpu
from jax.scipy.special import digamma as _jsp_digamma
from jax.scipy.special import gammaln as _jsp_gammaln


_HALF_LOG_2PI = 0.9189385332046727  # 0.5 * log(2*pi)
_EPS = 1e-6
_LOGIT_CLAMP = 40.0  # exp(40) ~ 2.4e17; keeps alpha and pair products finite.


def _lgamma_digamma(x):
    """Fused lgamma(x), digamma(x) for f32 x > 0.

    Shared recurrence shift by 8, then Stirling asymptotic series.  The
    lgamma shift uses logs of pairwise products (4 logs instead of 8);
    safe for x up to ~1.8e19 (inputs are clamped well below that).
    """
    x1 = x + 1.0
    x2 = x + 2.0
    x3 = x + 3.0
    x4 = x + 4.0
    x5 = x + 5.0
    x6 = x + 6.0
    x7 = x + 7.0
    z = x + 8.0

    # digamma recurrence: sum_{i=0..7} 1/(x+i)
    rsum = (1.0 / x + 1.0 / x1 + 1.0 / x2 + 1.0 / x3
            + 1.0 / x4 + 1.0 / x5 + 1.0 / x6 + 1.0 / x7)
    # lgamma recurrence: sum_{i=0..7} log(x+i), via pairwise products.
    log_shift = (jnp.log(x * x1) + jnp.log(x2 * x3)
                 + jnp.log(x4 * x5) + jnp.log(x6 * x7))

    zi = 1.0 / z
    zi2 = zi * zi
    log_z = jnp.log(z)

    lg_series = zi * (1.0 / 12.0
                      + zi2 * (-1.0 / 360.0
                               + zi2 * (1.0 / 1260.0
                                        + zi2 * (-1.0 / 1680.0))))
    lgam = (z - 0.5) * log_z - z + _HALF_LOG_2PI + lg_series - log_shift

    dg_series = zi2 * (1.0 / 12.0 - zi2 * (1.0 / 120.0 - zi2 * (1.0 / 252.0)))
    digam = log_z - 0.5 * zi - dg_series - rsum

    return lgam, digam


def _diff_e_kernel(x_ref, wt_ref, b_ref, o_ref, acc_ref):
    """Grid = (batch tiles, D tiles).  acc_ref: (K, TILE_B) f32 logits."""
    k = pl.program_id(1)

    @pl.when(k == 0)
    def _():
        acc_ref[...] = jnp.zeros_like(acc_ref)

    # (K, TILE_D) contracted with (TILE_B, TILE_D) over the last dims
    # -> (K, TILE_B): logits land lane-major (batch on the 128-lane axis).
    acc_ref[...] += lax.dot_general(
        wt_ref[...], x_ref[...],
        dimension_numbers=(((1,), (1,)), ((), ())),
        preferred_element_type=jnp.float32)

    @pl.when(k == pl.num_programs(1) - 1)
    def _():
        logits = acc_ref[...] + b_ref[...]              # (K, TILE_B)
        logits = jnp.minimum(logits, _LOGIT_CLAMP)      # overflow guard
        alpha = jnp.exp(logits) + _EPS                  # Dirichlet alphas > 0
        alpha0 = jnp.sum(alpha, axis=0, keepdims=True)  # (1, TILE_B)

        lg_a, dg_a = _lgamma_digamma(alpha)
        lg_a0, dg_a0 = _lgamma_digamma(alpha0)

        log_term = jnp.sum(lg_a, axis=0, keepdims=True) - lg_a0
        digamma_term = jnp.sum((alpha - 1.0) * (dg_a - dg_a0),
                               axis=0, keepdims=True)
        o_ref[...] = log_term - digamma_term            # (1, TILE_B)


def diff_e_predictor(x_nchw, w, b, *, tile_b=256, tile_d=512):
    """x_nchw: (B, C, H, W);  w: (D, K);  b: (K,).  Returns (B, 1) f32."""
    B = x_nchw.shape[0]
    D, K = w.shape
    x_flat = x_nchw.reshape(B, D)

    tb = min(tile_b, B)
    td = min(tile_d, D)
    b_pad = pl.cdiv(B, tb) * tb
    d_pad = pl.cdiv(D, td) * td

    if b_pad != B or d_pad != D:
        x_flat = jnp.pad(x_flat, ((0, b_pad - B), (0, d_pad - D)))
    x_bf = x_flat.astype(jnp.bfloat16)

    w_t = w.T  # (K, D) — tiny, cheap to pre-transpose in the wrapper.
    if d_pad != D:
        w_t = jnp.pad(w_t, ((0, 0), (0, d_pad - D)))
    w_bf = w_t.astype(jnp.bfloat16)

    b2 = b.reshape(K, 1).astype(jnp.float32)

    grid = (b_pad // tb, d_pad // td)

    cost = pl.CostEstimate(
        flops=2 * b_pad * d_pad * K,
        transcendentals=b_pad * (K + 1) * 15,
        bytes_accessed=(b_pad * d_pad * 2            # X stream (bf16)
                        + grid[0] * K * d_pad * 2    # W^T per batch tile
                        + K * 4 + b_pad * 4))        # bias + output

    out = pl.pallas_call(
        _diff_e_kernel,
        out_shape=jax.ShapeDtypeStruct((1, b_pad), jnp.float32),
        grid_spec=pltpu.PrefetchScalarGridSpec(
            num_scalar_prefetch=0,
            grid=grid,
            in_specs=[
                pl.BlockSpec((tb, td), lambda i, k: (i, k)),   # X tile
                pl.BlockSpec((K, td), lambda i, k: (0, k)),    # W^T tile
                pl.BlockSpec((K, 1), lambda i, k: (0, 0)),     # bias
            ],
            out_specs=pl.BlockSpec((1, tb), lambda i, k: (0, i)),
            scratch_shapes=[pltpu.VMEM((K, tb), jnp.float32)],
        ),
        compiler_params=pltpu.CompilerParams(
            dimension_semantics=("parallel", "arbitrary"),
            vmem_limit_bytes=32 * 1024 * 1024),
        cost_estimate=cost,
    )(x_bf, w_bf, b2)

    return out[0, :B].reshape(B, 1)


def _reference(x_nchw, w, b):
    """Pure-JAX reference using the same bf16-quantized inputs."""
    B = x_nchw.shape[0]
    D, K = w.shape
    xq = x_nchw.reshape(B, D).astype(jnp.bfloat16).astype(jnp.float32)
    wq = w.astype(jnp.bfloat16).astype(jnp.float32)
    logits = jnp.minimum(xq @ wq + b[None, :], _LOGIT_CLAMP)
    alpha = jnp.exp(logits) + _EPS
    alpha0 = alpha.sum(-1)
    log_term = _jsp_gammaln(alpha).sum(-1) - _jsp_gammaln(alpha0)
    dg_term = ((alpha - 1.0)
               * (_jsp_digamma(alpha) - _jsp_digamma(alpha0)[:, None])).sum(-1)
    return (log_term - dg_term)[:, None]


if __name__ == "__main__":
    # Small shapes consistent with the module: NCHW image input, K classes.
    B, C, H, W = 2, 4, 16, 16
    D = C * H * W
    K = 8

    key = jax.random.PRNGKey(0)
    kx, kw, kb = jax.random.split(key, 3)

    x = jax.random.normal(kx, (B, C, H, W), dtype=jnp.float32)
    # Deterministic synthetic "base_detector" parameters (no checkpoint load).
    # TODO(synk): the real base_detector is an external module; it is
    # synthesized here as a linear head + exp producing Dirichlet alphas.
    w = 0.01 * jax.random.normal(kw, (D, K), dtype=jnp.float32)
    b = 0.1 * jax.random.normal(kb, (K,), dtype=jnp.float32)

    out = diff_e_predictor(x, w, b)
    out = jax.block_until_ready(out)

    assert out.shape == (B, 1)
    assert bool(jnp.all(jnp.isfinite(out)))

    ref = _reference(x, w, b)
    assert bool(jnp.allclose(out, ref, rtol=1e-2, atol=1e-2)), (out, ref)

    print("KERNEL_OK")
</pallas_src>

<mosaic_0001>
module attributes {stable_mosaic.version = 11 : i64} {
  func.func @_diff_e_kernel(%arg0: i32, %arg1: i32, %arg2: memref<2x512xbf16, #tpu.memory_space<vmem>>, %arg3: memref<8x512xbf16, #tpu.memory_space<vmem>>, %arg4: memref<8x1xf32, #tpu.memory_space<vmem>>, %arg5: memref<1x2xf32, #tpu.memory_space<vmem>>, %arg6: memref<8x2xf32, #tpu.memory_space<vmem>>) attributes {dimension_semantics = [#tpu.dimension_semantics<parallel>, #tpu.dimension_semantics<arbitrary>], iteration_bounds = array<i64: 1, 2>, scalar_prefetch = 0 : i64, scratch_operands = 1 : i64, tpu.core_type = #tpu.core_type<tc>, window_params = [{transform_indices = @transform_0, window_bounds = array<i64: 2, 512>}, {transform_indices = @transform_1, window_bounds = array<i64: 8, 512>}, {pipeline_mode = #tpu.pipeline_mode<synchronous>, transform_indices = @transform_2, window_bounds = array<i64: 8, 1>}, {transform_indices = @transform_3, window_bounds = array<i64: 1, 2>}]} {
    %c0_i32 = arith.constant 0 : i32
    %0 = arith.cmpi eq, %arg1, %c0_i32 : i32
    %1 = arith.extui %0 : i1 to i32
    %c0_i32_0 = arith.constant 0 : i32
    %2 = arith.cmpi ne, %1, %c0_i32_0 : i32
    scf.if %2 {
      %cst_9 = arith.constant 0.000000e+00 : f32
      %12 = vector.broadcast %cst_9 : f32 to vector<8x2xf32>
      %c0_10 = arith.constant 0 : index
      %c0_11 = arith.constant 0 : index
      %13 = vector.load %arg6[%c0_10, %c0_11] : memref<8x2xf32, #tpu.memory_space<vmem>>, vector<8x2xf32>
      tpu.vector_store %arg6[%c0_10, %c0_11], %12 {strides = array<i32>} : memref<8x2xf32, #tpu.memory_space<vmem>>, vector<8x2xf32>,
    } else {
    }
    %c0 = arith.constant 0 : index
    %c0_1 = arith.constant 0 : index
    %3 = vector.load %arg6[%c0, %c0_1] : memref<8x2xf32, #tpu.memory_space<vmem>>, vector<8x2xf32>
    %c0_2 = arith.constant 0 : index
    %c0_3 = arith.constant 0 : index
    %4 = vector.load %arg3[%c0_2, %c0_3] : memref<8x512xbf16, #tpu.memory_space<vmem>>, vector<8x512xbf16>
    %c0_4 = arith.constant 0 : index
    %c0_5 = arith.constant 0 : index
    %5 = vector.load %arg2[%c0_4, %c0_5] : memref<2x512xbf16, #tpu.memory_space<vmem>>, vector<2x512xbf16>
    %cst = arith.constant dense<0.000000e+00> : vector<8x2xf32>
    %6 = tpu.matmul %4, %5, %cst {dimension_numbers = #tpu.dot_dimension_numbers<[1], [1], [0], [0], [0, 0, 1, 0], [], []>} : vector<8x512xbf16>, vector<2x512xbf16>, vector<8x2xf32> -> vector<8x2xf32>
    %7 = arith.addf %3, %6 : vector<8x2xf32>
    %c0_6 = arith.constant 0 : index
    %c0_7 = arith.constant 0 : index
    %8 = vector.load %arg6[%c0_6, %c0_7] : memref<8x2xf32, #tpu.memory_space<vmem>>, vector<8x2xf32>
    tpu.vector_store %arg6[%c0_6, %c0_7], %7 {strides = array<i32>} : memref<8x2xf32, #tpu.memory_space<vmem>>, vector<8x2xf32>,
    %c1_i32 = arith.constant 1 : i32
    %9 = arith.cmpi eq, %arg1, %c1_i32 : i32
    %10 = arith.extui %9 : i1 to i32
    %c0_i32_8 = arith.constant 0 : i32
    %11 = arith.cmpi ne, %10, %c0_i32_8 : i32
    scf.if %11 {
      %c0_9 = arith.constant 0 : index
      %c0_10 = arith.constant 0 : index
      %12 = vector.load %arg6[%c0_9, %c0_10] : memref<8x2xf32, #tpu.memory_space<vmem>>, vector<8x2xf32>
      %c0_11 = arith.constant 0 : index
      %c0_12 = arith.constant 0 : index
      %13 = vector.load %arg4[%c0_11, %c0_12] : memref<8x1xf32, #tpu.memory_space<vmem>>, vector<8x1xf32>
      %14 = vector.broadcast %13 : vector<8x1xf32> to vector<8x2xf32>
      %15 = arith.addf %12, %14 : vector<8x2xf32>
      %cst_13 = arith.constant 4.000000e+01 : f32
      %16 = vector.broadcast %cst_13 : f32 to vector<8x2xf32>
      %17 = arith.minimumf %15, %16 : vector<8x2xf32>
      %18 = math.exp %17 : vector<8x2xf32>
      %cst_14 = arith.constant 9.99999997E-7 : f32
      %19 = vector.broadcast %cst_14 : f32 to vector<8x2xf32>
      %20 = arith.addf %18, %19 : vector<8x2xf32>
      %cst_15 = arith.constant dense<0.000000e+00> : vector<2xf32>
      %21 = vector.multi_reduction <add>, %20, %cst_15 [0] : vector<8x2xf32> to vector<2xf32>
      %22 = vector.shape_cast %21 : vector<2xf32> to vector<1x2xf32>
      %cst_16 = arith.constant 1.000000e+00 : f32
      %23 = vector.broadcast %cst_16 : f32 to vector<8x2xf32>
      %24 = arith.addf %20, %23 : vector<8x2xf32>
      %cst_17 = arith.constant 2.000000e+00 : f32
      %25 = vector.broadcast %cst_17 : f32 to vector<8x2xf32>
      %26 = arith.addf %20, %25 : vector<8x2xf32>
      %cst_18 = arith.constant 3.000000e+00 : f32
      %27 = vector.broadcast %cst_18 : f32 to vector<8x2xf32>
      %28 = arith.addf %20, %27 : vector<8x2xf32>
      %cst_19 = arith.constant 4.000000e+00 : f32
      %29 = vector.broadcast %cst_19 : f32 to vector<8x2xf32>
      %30 = arith.addf %20, %29 : vector<8x2xf32>
      %cst_20 = arith.constant 5.000000e+00 : f32
      %31 = vector.broadcast %cst_20 : f32 to vector<8x2xf32>
      %32 = arith.addf %20, %31 : vector<8x2xf32>
      %cst_21 = arith.constant 6.000000e+00 : f32
      %33 = vector.broadcast %cst_21 : f32 to vector<8x2xf32>
      %34 = arith.addf %20, %33 : vector<8x2xf32>
      %cst_22 = arith.constant 7.000000e+00 : f32
      %35 = vector.broadcast %cst_22 : f32 to vector<8x2xf32>
      %36 = arith.addf %20, %35 : vector<8x2xf32>
      %cst_23 = arith.constant 8.000000e+00 : f32
      %37 = vector.broadcast %cst_23 : f32 to vector<8x2xf32>
      %38 = arith.addf %20, %37 : vector<8x2xf32>
      %cst_24 = arith.constant 1.000000e+00 : f32
      %39 = vector.broadcast %cst_24 : f32 to vector<8x2xf32>
      %40 = arith.divf %39, %20 : vector<8x2xf32>
      %cst_25 = arith.constant 1.000000e+00 : f32
      %41 = vector.broadcast %cst_25 : f32 to vector<8x2xf32>
      %42 = arith.divf %41, %24 : vector<8x2xf32>
      %43 = arith.addf %40, %42 : vector<8x2xf32>
      %cst_26 = arith.constant 1.000000e+00 : f32
      %44 = vector.broadcast %cst_26 : f32 to vector<8x2xf32>
      %45 = arith.divf %44, %26 : vector<8x2xf32>
      %46 = arith.addf %43, %45 : vector<8x2xf32>
      %cst_27 = arith.constant 1.000000e+00 : f32
      %47 = vector.broadcast %cst_27 : f32 to vector<8x2xf32>
      %48 = arith.divf %47, %28 : vector<8x2xf32>
      %49 = arith.addf %46, %48 : vector<8x2xf32>
      %cst_28 = arith.constant 1.000000e+00 : f32
      %50 = vector.broadcast %cst_28 : f32 to vector<8x2xf32>
      %51 = arith.divf %50, %30 : vector<8x2xf32>
      %52 = arith.addf %49, %51 : vector<8x2xf32>
      %cst_29 = arith.constant 1.000000e+00 : f32
      %53 = vector.broadcast %cst_29 : f32 to vector<8x2xf32>
      %54 = arith.divf %53, %32 : vector<8x2xf32>
      %55 = arith.addf %52, %54 : vector<8x2xf32>
      %cst_30 = arith.constant 1.000000e+00 : f32
      %56 = vector.broadcast %cst_30 : f32 to vector<8x2xf32>
      %57 = arith.divf %56, %34 : vector<8x2xf32>
      %58 = arith.addf %55, %57 : vector<8x2xf32>
      %cst_31 = arith.constant 1.000000e+00 : f32
      %59 = vector.broadcast %cst_31 : f32 to vector<8x2xf32>
      %60 = arith.divf %59, %36 : vector<8x2xf32>
      %61 = arith.addf %58, %60 : vector<8x2xf32>
      %62 = arith.mulf %20, %24 : vector<8x2xf32>
      %63 = math.log %62 : vector<8x2xf32>
      %64 = arith.mulf %26, %28 : vector<8x2xf32>
      %65 = math.log %64 : vector<8x2xf32>
      %66 = arith.addf %63, %65 : vector<8x2xf32>
      %67 = arith.mulf %30, %32 : vector<8x2xf32>
      %68 = math.log %67 : vector<8x2xf32>
      %69 = arith.addf %66, %68 : vector<8x2xf32>
      %70 = arith.mulf %34, %36 : vector<8x2xf32>
      %71 = math.log %70 : vector<8x2xf32>
      %72 = arith.addf %69, %71 : vector<8x2xf32>
      %cst_32 = arith.constant 1.000000e+00 : f32
      %73 = vector.broadcast %cst_32 : f32 to vector<8x2xf32>
      %74 = arith.divf %73, %38 : vector<8x2xf32>
      %75 = arith.mulf %74, %74 : vector<8x2xf32>
      %76 = math.log %38 : vector<8x2xf32>
      %cst_33 = arith.constant -5.95238118E-4 : f32
      %77 = vector.broadcast %cst_33 : f32 to vector<8x2xf32>
      %78 = arith.mulf %75, %77 : vector<8x2xf32>
      %cst_34 = arith.constant 7.93650805E-4 : f32
      %79 = vector.broadcast %cst_34 : f32 to vector<8x2xf32>
      %80 = arith.addf %79, %78 : vector<8x2xf32>
      %81 = arith.mulf %75, %80 : vector<8x2xf32>
      %cst_35 = arith.constant -0.00277777785 : f32
      %82 = vector.broadcast %cst_35 : f32 to vector<8x2xf32>
      %83 = arith.addf %82, %81 : vector<8x2xf32>
      %84 = arith.mulf %75, %83 : vector<8x2xf32>
      %cst_36 = arith.constant 0.0833333358 : f32
      %85 = vector.broadcast %cst_36 : f32 to vector<8x2xf32>
      %86 = arith.addf %85, %84 : vector<8x2xf32>
      %87 = arith.mulf %74, %86 : vector<8x2xf32>
      %cst_37 = arith.constant 5.000000e-01 : f32
      %88 = vector.broadcast %cst_37 : f32 to vector<8x2xf32>
      %89 = arith.subf %38, %88 : vector<8x2xf32>
      %90 = arith.mulf %89, %76 : vector<8x2xf32>
      %91 = arith.subf %90, %38 : vector<8x2xf32>
      %cst_38 = arith.constant 0.918938517 : f32
      %92 = vector.broadcast %cst_38 : f32 to vector<8x2xf32>
      %93 = arith.addf %91, %92 : vector<8x2xf32>
      %94 = arith.addf %93, %87 : vector<8x2xf32>
      %95 = arith.subf %94, %72 : vector<8x2xf32>
      %cst_39 = arith.constant 0.0039682542 : f32
      %96 = vector.broadcast %cst_39 : f32 to vector<8x2xf32>
      %97 = arith.mulf %75, %96 : vector<8x2xf32>
      %cst_40 = arith.constant 0.00833333377 : f32
      %98 = vector.broadcast %cst_40 : f32 to vector<8x2xf32>
      %99 = arith.subf %98, %97 : vector<8x2xf32>
      %100 = arith.mulf %75, %99 : vector<8x2xf32>
      %cst_41 = arith.constant 0.0833333358 : f32
      %101 = vector.broadcast %cst_41 : f32 to vector<8x2xf32>
      %102 = arith.subf %101, %100 : vector<8x2xf32>
      %103 = arith.mulf %75, %102 : vector<8x2xf32>
      %cst_42 = arith.constant 5.000000e-01 : f32
      %104 = vector.broadcast %cst_42 : f32 to vector<8x2xf32>
      %105 = arith.mulf %104, %74 : vector<8x2xf32>
      %106 = arith.subf %76, %105 : vector<8x2xf32>
      %107 = arith.subf %106, %103 : vector<8x2xf32>
      %108 = arith.subf %107, %61 : vector<8x2xf32>
      %cst_43 = arith.constant 1.000000e+00 : f32
      %109 = vector.broadcast %cst_43 : f32 to vector<1x2xf32>
      %110 = arith.addf %22, %109 : vector<1x2xf32>
      %cst_44 = arith.constant 2.000000e+00 : f32
      %111 = vector.broadcast %cst_44 : f32 to vector<1x2xf32>
      %112 = arith.addf %22, %111 : vector<1x2xf32>
      %cst_45 = arith.constant 3.000000e+00 : f32
      %113 = vector.broadcast %cst_45 : f32 to vector<1x2xf32>
      %114 = arith.addf %22, %113 : vector<1x2xf32>
      %cst_46 = arith.constant 4.000000e+00 : f32
      %115 = vector.broadcast %cst_46 : f32 to vector<1x2xf32>
      %116 = arith.addf %22, %115 : vector<1x2xf32>
      %cst_47 = arith.constant 5.000000e+00 : f32
      %117 = vector.broadcast %cst_47 : f32 to vector<1x2xf32>
      %118 = arith.addf %22, %117 : vector<1x2xf32>
      %cst_48 = arith.constant 6.000000e+00 : f32
      %119 = vector.broadcast %cst_48 : f32 to vector<1x2xf32>
      %120 = arith.addf %22, %119 : vector<1x2xf32>
      %cst_49 = arith.constant 7.000000e+00 : f32
      %121 = vector.broadcast %cst_49 : f32 to vector<1x2xf32>
      %122 = arith.addf %22, %121 : vector<1x2xf32>
      %cst_50 = arith.constant 8.000000e+00 : f32
      %123 = vector.broadcast %cst_50 : f32 to vector<1x2xf32>
      %124 = arith.addf %22, %123 : vector<1x2xf32>
      %cst_51 = arith.constant 1.000000e+00 : f32
      %125 = vector.broadcast %cst_51 : f32 to vector<1x2xf32>
      %126 = arith.divf %125, %22 : vector<1x2xf32>
      %cst_52 = arith.constant 1.000000e+00 : f32
      %127 = vector.broadcast %cst_52 : f32 to vector<1x2xf32>
      %128 = arith.divf %127, %110 : vector<1x2xf32>
      %129 = arith.addf %126, %128 : vector<1x2xf32>
      %cst_53 = arith.constant 1.000000e+00 : f32
      %130 = vector.broadcast %cst_53 : f32 to vector<1x2xf32>
      %131 = arith.divf %130, %112 : vector<1x2xf32>
      %132 = arith.addf %129, %131 : vector<1x2xf32>
      %cst_54 = arith.constant 1.000000e+00 : f32
      %133 = vector.broadcast %cst_54 : f32 to vector<1x2xf32>
      %134 = arith.divf %133, %114 : vector<1x2xf32>
      %135 = arith.addf %132, %134 : vector<1x2xf32>
      %cst_55 = arith.constant 1.000000e+00 : f32
      %136 = vector.broadcast %cst_55 : f32 to vector<1x2xf32>
      %137 = arith.divf %136, %116 : vector<1x2xf32>
      %138 = arith.addf %135, %137 : vector<1x2xf32>
      %cst_56 = arith.constant 1.000000e+00 : f32
      %139 = vector.broadcast %cst_56 : f32 to vector<1x2xf32>
      %140 = arith.divf %139, %118 : vector<1x2xf32>
      %141 = arith.addf %138, %140 : vector<1x2xf32>
      %cst_57 = arith.constant 1.000000e+00 : f32
      %142 = vector.broadcast %cst_57 : f32 to vector<1x2xf32>
      %143 = arith.divf %142, %120 : vector<1x2xf32>
      %144 = arith.addf %141, %143 : vector<1x2xf32>
      %cst_58 = arith.constant 1.000000e+00 : f32
      %145 = vector.broadcast %cst_58 : f32 to vector<1x2xf32>
      %146 = arith.divf %145, %122 : vector<1x2xf32>
      %147 = arith.addf %144, %146 : vector<1x2xf32>
      %148 = arith.mulf %22, %110 : vector<1x2xf32>
      %149 = math.log %148 : vector<1x2xf32>
      %150 = arith.mulf %112, %114 : vector<1x2xf32>
      %151 = math.log %150 : vector<1x2xf32>
      %152 = arith.addf %149, %151 : vector<1x2xf32>
      %153 = arith.mulf %116, %118 : vector<1x2xf32>
      %154 = math.log %153 : vector<1x2xf32>
      %155 = arith.addf %152, %154 : vector<1x2xf32>
      %156 = arith.mulf %120, %122 : vector<1x2xf32>
      %157 = math.log %156 : vector<1x2xf32>
      %158 = arith.addf %155, %157 : vector<1x2xf32>
      %cst_59 = arith.constant 1.000000e+00 : f32
      %159 = vector.broadcast %cst_59 : f32 to vector<1x2xf32>
      %160 = arith.divf %159, %124 : vector<1x2xf32>
      %161 = arith.mulf %160, %160 : vector<1x2xf32>
      %162 = math.log %124 : vector<1x2xf32>
      %cst_60 = arith.constant -5.95238118E-4 : f32
      %163 = vector.broadcast %cst_60 : f32 to vector<1x2xf32>
      %164 = arith.mulf %161, %163 : vector<1x2xf32>
      %cst_61 = arith.constant 7.93650805E-4 : f32
      %165 = vector.broadcast %cst_61 : f32 to vector<1x2xf32>
      %166 = arith.addf %165, %164 : vector<1x2xf32>
      %167 = arith.mulf %161, %166 : vector<1x2xf32>
      %cst_62 = arith.constant -0.00277777785 : f32
      %168 = vector.broadcast %cst_62 : f32 to vector<1x2xf32>
      %169 = arith.addf %168, %167 : vector<1x2xf32>
      %170 = arith.mulf %161, %169 : vector<1x2xf32>
      %cst_63 = arith.constant 0.0833333358 : f32
      %171 = vector.broadcast %cst_63 : f32 to vector<1x2xf32>
      %172 = arith.addf %171, %170 : vector<1x2xf32>
      %173 = arith.mulf %160, %172 : vector<1x2xf32>
      %cst_64 = arith.constant 5.000000e-01 : f32
      %174 = vector.broadcast %cst_64 : f32 to vector<1x2xf32>
      %175 = arith.subf %124, %174 : vector<1x2xf32>
      %176 = arith.mulf %175, %162 : vector<1x2xf32>
      %177 = arith.subf %176, %124 : vector<1x2xf32>
      %cst_65 = arith.constant 0.918938517 : f32
      %178 = vector.broadcast %cst_65 : f32 to vector<1x2xf32>
      %179 = arith.addf %177, %178 : vector<1x2xf32>
      %180 = arith.addf %179, %173 : vector<1x2xf32>
      %181 = arith.subf %180, %158 : vector<1x2xf32>
      %cst_66 = arith.constant 0.0039682542 : f32
      %182 = vector.broadcast %cst_66 : f32 to vector<1x2xf32>
      %183 = arith.mulf %161, %182 : vector<1x2xf32>
      %cst_67 = arith.constant 0.00833333377 : f32
      %184 = vector.broadcast %cst_67 : f32 to vector<1x2xf32>
      %185 = arith.subf %184, %183 : vector<1x2xf32>
      %186 = arith.mulf %161, %185 : vector<1x2xf32>
      %cst_68 = arith.constant 0.0833333358 : f32
      %187 = vector.broadcast %cst_68 : f32 to vector<1x2xf32>
      %188 = arith.subf %187, %186 : vector<1x2xf32>
      %189 = arith.mulf %161, %188 : vector<1x2xf32>
      %cst_69 = arith.constant 5.000000e-01 : f32
      %190 = vector.broadcast %cst_69 : f32 to vector<1x2xf32>
      %191 = arith.mulf %190, %160 : vector<1x2xf32>
      %192 = arith.subf %162, %191 : vector<1x2xf32>
      %193 = arith.subf %192, %189 : vector<1x2xf32>
      %194 = arith.subf %193, %147 : vector<1x2xf32>
      %cst_70 = arith.constant dense<0.000000e+00> : vector<2xf32>
      %195 = vector.multi_reduction <add>, %95, %cst_70 [0] : vector<8x2xf32> to vector<2xf32>
      %196 = vector.shape_cast %195 : vector<2xf32> to vector<1x2xf32>
      %197 = arith.subf %196, %181 : vector<1x2xf32>
      %cst_71 = arith.constant 1.000000e+00 : f32
      %198 = vector.broadcast %cst_71 : f32 to vector<8x2xf32>
      %199 = arith.subf %20, %198 : vector<8x2xf32>
      %200 = vector.broadcast %194 : vector<1x2xf32> to vector<8x2xf32>
      %201 = arith.subf %108, %200 : vector<8x2xf32>
      %202 = arith.mulf %199, %201 : vector<8x2xf32>
      %cst_72 = arith.constant dense<0.000000e+00> : vector<2xf32>
      %203 = vector.multi_reduction <add>, %202, %cst_72 [0] : vector<8x2xf32> to vector<2xf32>
      %204 = vector.shape_cast %203 : vector<2xf32> to vector<1x2xf32>
      %205 = arith.subf %197, %204 : vector<1x2xf32>
      %c0_73 = arith.constant 0 : index
      %c0_74 = arith.constant 0 : index
      %206 = vector.load %arg5[%c0_73, %c0_74] : memref<1x2xf32, #tpu.memory_space<vmem>>, vector<1x2xf32>
      tpu.vector_store %arg5[%c0_73, %c0_74], %205 {strides = array<i32>} : memref<1x2xf32, #tpu.memory_space<vmem>>, vector<1x2xf32>,
    } else {
    }
    return
  }
  func.func @transform_0(%arg0: i32, %arg1: i32) -> (i32, i32) {
    %c0_i32 = arith.constant 0 : i32
    return %arg0, %arg1 : i32, i32
  }
  func.func @transform_1(%arg0: i32, %arg1: i32) -> (i32, i32) {
    %c0_i32 = arith.constant 0 : i32
    %c0_i32_0 = arith.constant 0 : i32
    return %c0_i32, %arg1 : i32, i32
  }
  func.func @transform_2(%arg0: i32, %arg1: i32) -> (i32, i32) {
    %c0_i32 = arith.constant 0 : i32
    %c0_i32_0 = arith.constant 0 : i32
    %c0_i32_1 = arith.constant 0 : i32
    return %c0_i32, %c0_i32_0 : i32, i32
  }
  func.func @transform_3(%arg0: i32, %arg1: i32) -> (i32, i32) {
    %c0_i32 = arith.constant 0 : i32
    %c0_i32_0 = arith.constant 0 : i32
    return %c0_i32, %arg0 : i32, i32
  }
}

</mosaic_0001>

<llo_original>
// kernel: tpu_custom_call.1
$region0: #{tpu_custom_call.1}
  #allocation0 [shape = 'u32[]', space=smem, size = 0x4, offset = 0x4, fixed_abs, tag = 'smem constant byte address 0x4 - core index']
  #allocation1 [shape = 'u32[72,128]{1,0:T(1,128)}', space=vmem, size = 0x9000, scoped, tag = 'internal scratch']
  #allocation2 [shape = 'f32[8,2]{1,0:T(8,128)}', space=vmem, size = 0x1000, scoped, tag = 'scratch operand']
  %s0 = inlined_call_operand.vmem [shape: bf16[2,1024], index: 0, kind: input, shape index: {}]
  %s1 = inlined_call_operand.hbm [shape: bf16[8,1024], index: 1, kind: input, shape index: {}]
  %s2 = inlined_call_operand.vmem [shape: f32[8,1], index: 2, kind: input, shape index: {}]
  %s3 = inlined_call_operand.hbm [shape: f32[1,2], index: 3, kind: output, shape index: {}]
  %s4 = sld [smem:[#allocation0]]
  $region57: #{tpu_custom_call.1} parent=0
    _
  %s6 = ssub.s32 1, %s4
  %s7 = scalar_select 0, %s6, %s4
  $region1: #{tpu_custom_call.1} parent=0
    #allocation3 [shape = 'u8[16384]{0}', space=vmem, size = 0x4000, scoped, tag = 'input window, operand 1']
    #allocation4 [shape = 's32[2]{0}', space=sflag, size = 0x8, scoped, tag = 'scoped memory for tpu_custom_call.1']
    #allocation5 [shape = 's32[2]{0}', space=sflag, size = 0x8, scoped, tag = 'scoped memory for tpu_custom_call.1']
    #allocation6 [shape = 'u8[512]{0}', space=vmem, size = 0x400, scoped, tag = 'output window, operand 0, single buffered']
    %8 = vsyncpa [#allocation4], 0
    %s9 = scalar_lea.sflag [#allocation4], 1
    %10 = vsyncpa %s9, 0
    %11 = vsyncpa [#allocation5], 0
    loop: start=0, step=1, limit=4
    $region2: #{tpu_custom_call.1} parent=1 // loop_pre_header
      _
    $region3: #{tpu_custom_call.1} parent=1 // loop_header
      %s13 = sphi 0, %s17
      %p14 = scmp.ge.s32.totalorder %s13, 4
      %s20 = sphi 0, %s32
      %s21 = sphi 0, %s28
      %s22 = sphi 0, %s20
      %s23 = sphi 0, %s21
      %s24 = sphi 0, %s22
      %s25 = sphi 0, %s23
      %s37 = sphi 0, %s39
      %s40 = sphi 0, %s37
      %s41 = sphi 0, %s40
      %s57 = sphi 0, %s41
      %s63 = sphi 0, %s65
      %s66 = sphi 0, %s63
      %s67 = sphi 0, %s66
      %s83 = sphi 0, %s67
      %s87 = sphi 0, %s87
      %s89 = sphi 0, %s87
      %s90 = sphi 0, %s89
      %s104 = sphi 0, %s90
      %s110 = sphi 0, %s112
      %s113 = sphi 0, %s110
      %s114 = sphi 0, %s113
      %s130 = sphi 0, %s114
    $region4: #{tpu_custom_call.1} parent=1 // loop_header_branch
      %16 = sbr.rel (%p14) target = $region8
    $region5: #{tpu_custom_call.1} parent=1 // loop_body
      %s18 = ssub.s32 %s13, 1
      %s19 = ssub.s32 %s13, 2
      %s26 = sadd.s32 1, %s21
      %p27 = scmp.ge.s32.totalorder %s26, 2
      %s28 = scalar_select %p27, 0, %s26
      %s29 = sadd.s32 1, %s20
      %s30 = scalar_select %p27, %s29, %s20
      %p31 = scmp.ge.s32.totalorder %s30, 1
      %s32 = scalar_select %p31, 0, %s30
      %s33 = ssub.s32 %s20, %s32
      %s34 = ssub.s32 %s21, %s28
      %s35 = sor.u32 %s33, %s34
      %p36 = scmp.eq.s32.totalorder %s35, 0
      %s38 = sadd.s32 %s37, 1
      %s39 = scalar_select %p36, %s37, %s38
      %p42 = pneg %p36
      %p43 = scmp.eq.s32.totalorder %s13, 1
      %p44 = por %p42, %p43
      %p45 = scmp.ne.s32.totalorder %s37, %s40
      %p46 = scmp.eq.s32.totalorder %s13, 0
      %p47 = por %p45, %p46
      %p48 = scmp.ne.s32.totalorder %s37, %s40
      %p49 = scmp.eq.s32.totalorder %s18, 1
      %p50 = por %p48, %p49
      %p51 = scmp.ne.s32.totalorder %s40, %s41
      %p52 = scmp.eq.s32.totalorder %s18, 0
      %p53 = por %p51, %p52
      %p54 = scmp.ne.s32.totalorder %s40, %s41
      %p55 = scmp.eq.s32.totalorder %s19, 1
      %p56 = por %p54, %p55
      %p58 = scmp.ne.s32.totalorder %s41, %s57
      %p59 = scmp.eq.s32.totalorder %s19, 0
      %p60 = por %p58, %p59
      %s61 = ssub.s32 %s21, %s28
      %p62 = scmp.eq.s32.totalorder %s61, 0
      %s64 = sadd.s32 %s63, 1
      %s65 = scalar_select %p62, %s63, %s64
      %p68 = pneg %p62
      %p69 = scmp.eq.s32.totalorder %s13, 1
      %p70 = por %p68, %p69
      %p71 = scmp.ne.s32.totalorder %s63, %s66
      %p72 = scmp.eq.s32.totalorder %s13, 0
      %p73 = por %p71, %p72
      %p74 = scmp.ne.s32.totalorder %s63, %s66
      %p75 = scmp.eq.s32.totalorder %s18, 1
      %p76 = por %p74, %p75
      %p77 = scmp.ne.s32.totalorder %s66, %s67
      %p78 = scmp.eq.s32.totalorder %s18, 0
      %p79 = por %p77, %p78
      %p80 = scmp.ne.s32.totalorder %s66, %s67
      %p81 = scmp.eq.s32.totalorder %s19, 1
      %p82 = por %p80, %p81
      %p84 = scmp.ne.s32.totalorder %s67, %s83
      %p85 = scmp.eq.s32.totalorder %s19, 0
      %p86 = por %p84, %p85
      %s88 = sadd.s32 %s87, 1
      %p91 = scmp.eq.s32.totalorder %s13, 1
      %p92 = scmp.ne.s32.totalorder %s87, %s89
      %p93 = scmp.eq.s32.totalorder %s13, 0
      %p94 = por %p92, %p93
      %p95 = scmp.ne.s32.totalorder %s87, %s89
      %p96 = scmp.eq.s32.totalorder %s18, 1
      %p97 = por %p95, %p96
      %p98 = scmp.ne.s32.totalorder %s89, %s90
      %p99 = scmp.eq.s32.totalorder %s18, 0
      %p100 = por %p98, %p99
      %p101 = scmp.ne.s32.totalorder %s89, %s90
      %p102 = scmp.eq.s32.totalorder %s19, 1
      %p103 = por %p101, %p102
      %p105 = scmp.ne.s32.totalorder %s90, %s104
      %p106 = scmp.eq.s32.totalorder %s19, 0
      %p107 = por %p105, %p106
      %s108 = ssub.s32 %s20, %s32
      %p109 = scmp.eq.s32.totalorder %s108, 0
      %s111 = sadd.s32 %s110, 1
      %s112 = scalar_select %p109, %s110, %s111
      %p115 = pneg %p109
      %p116 = scmp.eq.s32.totalorder %s13, 1
      %p117 = por %p115, %p116
      %p118 = scmp.ne.s32.totalorder %s110, %s113
      %p119 = scmp.eq.s32.totalorder %s13, 0
      %p120 = por %p118, %p119
      %p121 = scmp.ne.s32.totalorder %s110, %s113
      %p122 = scmp.eq.s32.totalorder %s18, 1
      %p123 = por %p121, %p122
      %p124 = scmp.ne.s32.totalorder %s113, %s114
      %p125 = scmp.eq.s32.totalorder %s18, 0
      %p126 = por %p124, %p125
      %p127 = scmp.ne.s32.totalorder %s113, %s114
      %p128 = scmp.eq.s32.totalorder %s19, 1
      %p129 = por %p127, %p128
      %p131 = scmp.ne.s32.totalorder %s114, %s130
      %p132 = scmp.eq.s32.totalorder %s19, 0
      %p133 = por %p131, %p132
      %p134 = scmp.le.s32.totalorder 1, %s13
      %p135 = scmp.lt.s32.totalorder %s13, 3
      %p136 = pnand %p134, %p135
      %p137 = pneg %p136
      // Predicated region
      $region9: #{tpu_custom_call.1} parent=5 // pred_check
        _
      $region10: #{tpu_custom_call.1} parent=5 // pred_check_branch
        %139 = sbr.rel (%p136) target = $region12
      $region11: #{tpu_custom_call.1} parent=5 // pred_region
        %s140 = ssub.s32 %s13, 1
        // Predicated region
        $region13: #{tpu_custom_call.1} parent=11 // pred_check
          %p141 = pneg %p100
        $region14: #{tpu_custom_call.1} parent=11 // pred_check_branch
          %143 = sbr.rel (%p141) target = $region16
        $region15: #{tpu_custom_call.1} parent=11 // pred_region
          _
        $region16: #{tpu_custom_call.1} parent=11 // pred_fallthru
          _
      $region12: #{tpu_custom_call.1} parent=5 // pred_fallthru
        _
      %p144 = scmp.lt.s32.totalorder %s13, 2
      // Predicated region
      $region17: #{tpu_custom_call.1} parent=5 // pred_check
        %p145 = pneg %p144
      $region18: #{tpu_custom_call.1} parent=5 // pred_check_branch
        %147 = sbr.rel (%p145) target = $region20
      $region19: #{tpu_custom_call.1} parent=5 // pred_region
        // Predicated region
        $region21: #{tpu_custom_call.1} parent=19 // pred_check
          %p148 = pneg %p47
        $region22: #{tpu_custom_call.1} parent=19 // pred_check_branch
          %150 = sbr.rel (%p148) target = $region24
        $region23: #{tpu_custom_call.1} parent=19 // pred_region
          %s151 = smul.u32 4, %s21
          %p152 = scmp.lt.s32.totalorder %s20, 0
          %s153 = scalar_select %p152, %s20, 0
          %p154 = scmp.lt.s32.totalorder %s151, 7
          %s155 = scalar_select %p154, %s151, 7
          %s156 = smul.addr %s153, 8
          %s157 = sadd.s32 %s155, %s156
          %s158 = scalar_lea.vmem %s0, %s157
          %s159 = smul.u32 4, %s21
        $region24: #{tpu_custom_call.1} parent=19 // pred_fallthru
          _
        // Predicated region
        $region25: #{tpu_custom_call.1} parent=19 // pred_check
          %p160 = pneg %p73
        $region26: #{tpu_custom_call.1} parent=19 // pred_check_branch
          %162 = sbr.rel (%p160) target = $region28
        $region27: #{tpu_custom_call.1} parent=19 // pred_region
          %s163 = sand.u32 %s63, 1
          %s164 = scalar_lea.sflag [#allocation4], %s163
          %s165 = sand.u32 %s63, 1
          %s166 = smul.addr %s165, 16
          %s167 = scalar_lea.vmem [#allocation3], %s166
          %s168 = smul.u32 4, %s21
          %170 = vsyncadd %s164, 0
          %s171 = smul.addr %s168, 4
          %s172 = scalar_lea.hbm %s1, %s171
          %s174 = sshll.u32 %s172, 4
          %s175 = int_to_ptr.hbm [resolvable:$true] %s174
          %s176 = sshll.u32 %s167, 4
          %s177 = int_to_ptr.vmem [resolvable:$true] %s176
          %179 = dma.hbm_to_vmem [thread:$0]  %s175, 256, %s177, %s164
        $region28: #{tpu_custom_call.1} parent=19 // pred_fallthru
          _
      $region20: #{tpu_custom_call.1} parent=5 // pred_fallthru
        _
      %p180 = scmp.le.s32.totalorder 1, %s13
      %p181 = scmp.lt.s32.totalorder %s13, 3
      %p182 = pnand %p180, %p181
      %p183 = pneg %p182
      // Predicated region
      $region29: #{tpu_custom_call.1} parent=5 // pred_check
        _
      $region30: #{tpu_custom_call.1} parent=5 // pred_check_branch
        %185 = sbr.rel (%p182) target = $region32
      $region31: #{tpu_custom_call.1} parent=5 // pred_region
        %s186 = ssub.s32 %s13, 1
        %s187 = sand.u32 %s66, 1
        %s188 = scalar_lea.sflag [#allocation4], %s187
        %s189 = sand.u32 %s66, 1
        %s190 = smul.addr %s189, 16
        %s191 = scalar_lea.vmem [#allocation3], %s190
        // Predicated region
        $region33: #{tpu_custom_call.1} parent=31 // pred_check
          %p192 = pneg %p79
        $region34: #{tpu_custom_call.1} parent=31 // pred_check_branch
          %194 = sbr.rel (%p192) target = $region36
        $region35: #{tpu_custom_call.1} parent=31 // pred_region
          %196 = dma.done %s188, 256
        $region36: #{tpu_custom_call.1} parent=31 // pred_fallthru
          _
        %s197 = smul.u32 4, %s23
        %p198 = scmp.lt.s32.totalorder %s22, 0
        %s199 = scalar_select %p198, %s22, 0
        %p200 = scmp.lt.s32.totalorder %s197, 7
        %s201 = scalar_select %p200, %s197, 7
        %s202 = smul.addr %s199, 8
        %s203 = sadd.s32 %s201, %s202
        %s204 = scalar_lea.vmem %s0, %s203
        %p205 = pneg %p53
        %p206 = pneg %p50
        %s207 = sand.u32 %s66, 1
        %s208 = scalar_lea.sflag [#allocation4], %s207
        %s209 = sand.u32 %s66, 1
        %s210 = smul.addr %s209, 16
        %s211 = scalar_lea.vmem [#allocation3], %s210
        %p212 = pneg %p79
        %p213 = pneg %p76
        %p214 = pneg %p100
        %p215 = pneg %p97
        %p216 = pneg %p126
        %p217 = pneg %p123
        %s218 = smul.u32 4, %s23
        %p219 = scmp.lt.s32.totalorder %s22, 0
        %s220 = scalar_select %p219, %s22, 0
        %p221 = scmp.lt.s32.totalorder %s218, 7
        %s222 = scalar_select %p221, %s218, 7
        %s223 = smul.addr %s220, 8
        %s224 = sadd.s32 %s222, %s223
        %s225 = scalar_lea.vmem %s0, %s224
        %s226 = smul.u32 4, %s23
        %s227 = smul.u32 4, %s23
        %p229 = scmp.eq.s32.totalorder %s23, 0
        // Predicated region
        $region37: #{tpu_custom_call.1} parent=31 // pred_check
          %p230 = pneg %p229
        $region38: #{tpu_custom_call.1} parent=31 // pred_check_branch
          %232 = sbr.rel (%p230) target = $region40
        $region39: #{tpu_custom_call.1} parent=31 // pred_region
          %vm233 = vcmask 15360
          %234 = vst.msk [vmem:[#allocation2] sm:$0xff] %vm233, 0.0
        $region40: #{tpu_custom_call.1} parent=31 // pred_fallthru
          _
        %v235 = vld [vmem:[#allocation2] sm:$0xff]
        %v236 = vld [vmem:[%s191] sm:$0xff]
        %v237 = vld [vmem:[%s191 + $0x8] sm:$0xff]
        %v238 = vld [vmem:[%s225] sm:$0xf]
        %v241 = vunpack.c.l.b16 %v236
        %v242 = vunpack.c.h.b16 %v236
        %v243 = vunpack.c.l.b16 %v237
        %v244 = vunpack.c.h.b16 %v237
        %v245 = vpack.c.b16 %v241, %v241
        %v246 = vpack.c.b16 %v242, %v242
        %v247 = vpack.c.b16 %v243, %v243
        %v248 = vpack.c.b16 %v244, %v244
        %254 = vst [vmem:[#allocation1] ss:$9 sm:$0xff] %v238
        %v255 = vld [vmem:[#allocation1] sm:$0xff]
        %v256 = vld [vmem:[#allocation1 + $0x9] sm:$0xff]
        %v257 = vld [vmem:[#allocation1 + $0x12] sm:$0xff]
        %v258 = vld [vmem:[#allocation1 + $0x1b] sm:$0xff]
        %263 = vmatpush.bf16.xpose.msra.mxu0 0
        %264 = vmatpush.bf16.xpose.msra.mxu0 0
        %265 = vmatpush.bf16.xpose.msra.mxu0 0
        %266 = vmatpush.bf16.xpose.msra.mxu0 0
        %267 = vmatpush.bf16.xpose.msra.mxu0 0
        %268 = vmatpush.bf16.xpose.msra.mxu0 0
        %269 = vmatpush.bf16.xpose.msra.mxu0 0
        %270 = vmatpush.bf16.xpose.msra.mxu0 %v255
        %271 = vmatmul.bf16.gmra.mxu0 %v245
        %v272 = vpop.f32.mrf.mxu0
        %v273 = vadd.f32 0.0, %v272
        %v274 = vpop.f32.mrf.mxu0
        %275 = vdwg.mxu0
        %276 = vmatpush.bf16.xpose.msra.mxu0 0
        %277 = vmatpush.bf16.xpose.msra.mxu0 0
        %278 = vmatpush.bf16.xpose.msra.mxu0 0
        %279 = vmatpush.bf16.xpose.msra.mxu0 0
        %280 = vmatpush.bf16.xpose.msra.mxu0 0
        %281 = vmatpush.bf16.xpose.msra.mxu0 0
        %282 = vmatpush.bf16.xpose.msra.mxu0 0
        %283 = vmatpush.bf16.xpose.msra.mxu0 %v256
        %284 = vmatmul.bf16.gmra.mxu0 %v246
        %v285 = vpop.f32.mrf.mxu0
        %v286 = vadd.f32 %v273, %v285
        %v287 = vpop.f32.mrf.mxu0
        %288 = vdwg.mxu0
        %289 = vmatpush.bf16.xpose.msra.mxu0 0
        %290 = vmatpush.bf16.xpose.msra.mxu0 0
        %291 = vmatpush.bf16.xpose.msra.mxu0 0
        %292 = vmatpush.bf16.xpose.msra.mxu0 0
        %293 = vmatpush.bf16.xpose.msra.mxu0 0
        %294 = vmatpush.bf16.xpose.msra.mxu0 0
        %295 = vmatpush.bf16.xpose.msra.mxu0 0
        %296 = vmatpush.bf16.xpose.msra.mxu0 %v257
        %297 = vmatmul.bf16.gmra.mxu0 %v247
        %v298 = vpop.f32.mrf.mxu0
        %v299 = vadd.f32 %v286, %v298
        %v300 = vpop.f32.mrf.mxu0
        %301 = vdwg.mxu0
        %302 = vmatpush.bf16.xpose.msra.mxu0 0
        %303 = vmatpush.bf16.xpose.msra.mxu0 0
        %304 = vmatpush.bf16.xpose.msra.mxu0 0
        %305 = vmatpush.bf16.xpose.msra.mxu0 0
        %306 = vmatpush.bf16.xpose.msra.mxu0 0
        %307 = vmatpush.bf16.xpose.msra.mxu0 0
        %308 = vmatpush.bf16.xpose.msra.mxu0 0
        %309 = vmatpush.bf16.xpose.msra.mxu0 %v258
        %310 = vmatmul.bf16.gmra.mxu0 %v248
        %v311 = vpop.f32.mrf.mxu0
        %v312 = vadd.f32 %v299, %v311
        %v313 = vpop.f32.mrf.mxu0
        %314 = vdwg.mxu0
        %v315 = vadd.f32 %v235, %v312
        %vm316 = vcmask 15360
        %317 = vst.msk [vmem:[#allocation2] sm:$0xff] %vm316, %v315
        %p318 = scmp.eq.s32.totalorder %s23, 1
        // Predicated region
        $region41: #{tpu_custom_call.1} parent=31 // pred_check
          %p319 = pneg %p318
        $region42: #{tpu_custom_call.1} parent=31 // pred_check_branch
          %321 = sbr.rel (%p319) target = $region44
        $region43: #{tpu_custom_call.1} parent=31 // pred_region
          %v322 = vld [vmem:[#allocation2] sm:$0xff]
          %v323 = vld [vmem:[%s2] sm:$0xff]
          %325 = vset.pattern.permute.xlu0 0
          %326 = vperm.xlu0 %325, %v323
          %v327 = vpop.permute.xlu0 %326
          %v329 = vadd.f32 %v322, %v327
          %v330 = vmin.f32 %v329, 40.0
          %v331 = vmul.f32 %v330, 1.442695
          %v332 = vpow.pop %v331
          %v333 = vadd.f32 %v332, 1e-06
          %v334 = vsel %vm316, %v333, 0.0
          %v335 = vrot.slane %v334, 4
          %v336 = vadd.f32 %v334, %v335
          %v337 = vrot.slane %v336, 2
          %v338 = vadd.f32 %v336, %v337
          %v339 = vrot.slane %v338, 1
          %v340 = vadd.f32 %v338, %v339
          %v341 = vadd.f32 %v333, 1.0
          %v342 = vadd.f32 %v333, 2.0
          %v343 = vadd.f32 %v333, 3.0
          %v344 = vadd.f32 %v333, 4.0
          %v345 = vadd.f32 %v333, 5.0
          %v346 = vadd.f32 %v333, 6.0
          %v347 = vadd.f32 %v333, 7.0
          %v348 = vadd.f32 %v333, 8.0
          %v349 = vrcp.pop %v333
          %v350 = vmul.f32 %v333, %v349
          %v351 = vsub.f32 1.0, %v350
          %v352 = vmul.f32 %v349, %v351
          %v353 = vadd.f32 %v349, %v352
          %vm354 = vweird.f32 %v333
          %vm355 = vweird.f32 %v349
          %vm356 = vmor %vm354, %vm355
          %v357 = vsel %vm356, %v349, %v353
          %v358 = vand.u32 2147483647, %v333
          %vm359 = vcmp.eq.f32.partialorder %v358, 8.507059e+37
          %v360 = vand.u32 %v333, 2147483648
          %v361 = vor.u32 1.1754944e-38, %v360
          %v362 = vsel %vm359, %v361, %v357
          %v363 = vmul.f32 1.0, %v362
          %v364 = vrcp.pop %v341
          %v365 = vmul.f32 %v341, %v364
          %v366 = vsub.f32 1.0, %v365
          %v367 = vmul.f32 %v364, %v366
          %v368 = vadd.f32 %v364, %v367
          %vm369 = vweird.f32 %v341
          %vm370 = vweird.f32 %v364
          %vm371 = vmor %vm369, %vm370
          %v372 = vsel %vm371, %v364, %v368
          %v373 = vand.u32 2147483647, %v341
          %vm374 = vcmp.eq.f32.partialorder %v373, 8.507059e+37
          %v375 = vand.u32 %v341, 2147483648
          %v376 = vor.u32 1.1754944e-38, %v375
          %v377 = vsel %vm374, %v376, %v372
          %v378 = vmul.f32 1.0, %v377
          %v379 = vadd.f32 %v363, %v378
          %v380 = vrcp.pop %v342
          %v381 = vmul.f32 %v342, %v380
          %v382 = vsub.f32 1.0, %v381
          %v383 = vmul.f32 %v380, %v382
          %v384 = vadd.f32 %v380, %v383
          %vm385 = vweird.f32 %v342
          %vm386 = vweird.f32 %v380
          %vm387 = vmor %vm385, %vm386
          %v388 = vsel %vm387, %v380, %v384
          %v389 = vand.u32 2147483647, %v342
          %vm390 = vcmp.eq.f32.partialorder %v389, 8.507059e+37
          %v391 = vand.u32 %v342, 2147483648
          %v392 = vor.u32 1.1754944e-38, %v391
          %v393 = vsel %vm390, %v392, %v388
          %v394 = vmul.f32 1.0, %v393
          %v395 = vadd.f32 %v379, %v394
          %v396 = vrcp.pop %v343
          %v397 = vmul.f32 %v343, %v396
          %v398 = vsub.f32 1.0, %v397
          %v399 = vmul.f32 %v396, %v398
          %v400 = vadd.f32 %v396, %v399
          %vm401 = vweird.f32 %v343
          %vm402 = vweird.f32 %v396
          %vm403 = vmor %vm401, %vm402
          %v404 = vsel %vm403, %v396, %v400
          %v405 = vand.u32 2147483647, %v343
          %vm406 = vcmp.eq.f32.partialorder %v405, 8.507059e+37
          %v407 = vand.u32 %v343, 2147483648
          %v408 = vor.u32 1.1754944e-38, %v407
          %v409 = vsel %vm406, %v408, %v404
          %v410 = vmul.f32 1.0, %v409
          %v411 = vadd.f32 %v395, %v410
          %v412 = vrcp.pop %v344
          %v413 = vmul.f32 %v344, %v412
          %v414 = vsub.f32 1.0, %v413
          %v415 = vmul.f32 %v412, %v414
          %v416 = vadd.f32 %v412, %v415
          %vm417 = vweird.f32 %v344
          %vm418 = vweird.f32 %v412
          %vm419 = vmor %vm417, %vm418
          %v420 = vsel %vm419, %v412, %v416
          %v421 = vand.u32 2147483647, %v344
          %vm422 = vcmp.eq.f32.partialorder %v421, 8.507059e+37
          %v423 = vand.u32 %v344, 2147483648
          %v424 = vor.u32 1.1754944e-38, %v423
          %v425 = vsel %vm422, %v424, %v420
          %v426 = vmul.f32 1.0, %v425
          %v427 = vadd.f32 %v411, %v426
          %v428 = vrcp.pop %v345
          %v429 = vmul.f32 %v345, %v428
          %v430 = vsub.f32 1.0, %v429
          %v431 = vmul.f32 %v428, %v430
          %v432 = vadd.f32 %v428, %v431
          %vm433 = vweird.f32 %v345
          %vm434 = vweird.f32 %v428
          %vm435 = vmor %vm433, %vm434
          %v436 = vsel %vm435, %v428, %v432
          %v437 = vand.u32 2147483647, %v345
          %vm438 = vcmp.eq.f32.partialorder %v437, 8.507059e+37
          %v439 = vand.u32 %v345, 2147483648
          %v440 = vor.u32 1.1754944e-38, %v439
          %v441 = vsel %vm438, %v440, %v436
          %v442 = vmul.f32 1.0, %v441
          %v443 = vadd.f32 %v427, %v442
          %v444 = vrcp.pop %v346
          %v445 = vmul.f32 %v346, %v444
          %v446 = vsub.f32 1.0, %v445
          %v447 = vmul.f32 %v444, %v446
          %v448 = vadd.f32 %v444, %v447
          %vm449 = vweird.f32 %v346
          %vm450 = vweird.f32 %v444
          %vm451 = vmor %vm449, %vm450
          %v452 = vsel %vm451, %v444, %v448
          %v453 = vand.u32 2147483647, %v346
          %vm454 = vcmp.eq.f32.partialorder %v453, 8.507059e+37
          %v455 = vand.u32 %v346, 2147483648
          %v456 = vor.u32 1.1754944e-38, %v455
          %v457 = vsel %vm454, %v456, %v452
          %v458 = vmul.f32 1.0, %v457
          %v459 = vadd.f32 %v443, %v458
          %v460 = vrcp.pop %v347
          %v461 = vmul.f32 %v347, %v460
          %v462 = vsub.f32 1.0, %v461
          %v463 = vmul.f32 %v460, %v462
          %v464 = vadd.f32 %v460, %v463
          %vm465 = vweird.f32 %v347
          %vm466 = vweird.f32 %v460
          %vm467 = vmor %vm465, %vm466
          %v468 = vsel %vm467, %v460, %v464
          %v469 = vand.u32 2147483647, %v347
          %vm470 = vcmp.eq.f32.partialorder %v469, 8.507059e+37
          %v471 = vand.u32 %v347, 2147483648
          %v472 = vor.u32 1.1754944e-38, %v471
          %v473 = vsel %vm470, %v472, %v468
          %v474 = vmul.f32 1.0, %v473
          %v475 = vadd.f32 %v459, %v474
          %v476 = vmul.f32 %v333, %v341
          %v477 = vlog2.pop %v476
          %v478 = vmul.f32 %v477, 0.6931472
          %v479 = vmul.f32 %v342, %v343
          %v480 = vlog2.pop %v479
          %v481 = vmul.f32 %v480, 0.6931472
          %v482 = vadd.f32 %v478, %v481
          %v483 = vmul.f32 %v344, %v345
          %v484 = vlog2.pop %v483
          %v485 = vmul.f32 %v484, 0.6931472
          %v486 = vadd.f32 %v482, %v485
          %v487 = vmul.f32 %v346, %v347
          %v488 = vlog2.pop %v487
          %v489 = vmul.f32 %v488, 0.6931472
          %v490 = vadd.f32 %v486, %v489
          %v491 = vrcp.pop %v348
          %v492 = vmul.f32 %v348, %v491
          %v493 = vsub.f32 1.0, %v492
          %v494 = vmul.f32 %v491, %v493
          %v495 = vadd.f32 %v491, %v494
          %vm496 = vweird.f32 %v348
          %vm497 = vweird.f32 %v491
          %vm498 = vmor %vm496, %vm497
          %v499 = vsel %vm498, %v491, %v495
          %v500 = vand.u32 2147483647, %v348
          %vm501 = vcmp.eq.f32.partialorder %v500, 8.507059e+37
          %v502 = vand.u32 %v348, 2147483648
          %v503 = vor.u32 1.1754944e-38, %v502
          %v504 = vsel %vm501, %v503, %v499
          %v505 = vmul.f32 1.0, %v504
          %v506 = vmul.f32 %v505, %v505
          %v507 = vlog2.pop %v348
          %v508 = vmul.f32 %v507, 0.6931472
          %v509 = vmul.f32 %v506, -0.0005952381
          %v510 = vadd.f32 %v509, 0.0007936508
          %v511 = vmul.f32 %v506, %v510
          %v512 = vadd.f32 %v511, -0.0027777778
          %v513 = vmul.f32 %v506, %v512
          %v514 = vadd.f32 %v513, 0.083333336
          %v515 = vmul.f32 %v505, %v514
          %v516 = vsub.f32 %v348, 0.5
          %v517 = vmul.f32 %v516, %v508
          %v518 = vsub.f32 %v517, %v348
          %v519 = vadd.f32 %v518, 0.9189385
          %v520 = vadd.f32 %v519, %v515
          %v521 = vsub.f32 %v520, %v490
          %v522 = vmul.f32 %v506, 0.003968254
          %v523 = vsub.f32 0.008333334, %v522
          %v524 = vmul.f32 %v506, %v523
          %v525 = vsub.f32 0.083333336, %v524
          %v526 = vmul.f32 %v506, %v525
          %v527 = vmul.f32 %v505, 0.5
          %v528 = vsub.f32 %v508, %v527
          %v529 = vsub.f32 %v528, %v526
          %v530 = vsub.f32 %v529, %v475
          %v531 = vadd.f32 %v340, 1.0
          %v532 = vadd.f32 %v340, 2.0
          %v533 = vadd.f32 %v340, 3.0
          %v534 = vadd.f32 %v340, 4.0
          %v535 = vadd.f32 %v340, 5.0
          %v536 = vadd.f32 %v340, 6.0
          %v537 = vadd.f32 %v340, 7.0
          %v538 = vadd.f32 %v340, 8.0
          %v539 = vrcp.pop %v340
          %v540 = vmul.f32 %v340, %v539
          %v541 = vsub.f32 1.0, %v540
          %v542 = vmul.f32 %v539, %v541
          %v543 = vadd.f32 %v539, %v542
          %vm544 = vweird.f32 %v340
          %vm545 = vweird.f32 %v539
          %vm546 = vmor %vm544, %vm545
          %v547 = vsel %vm546, %v539, %v543
          %v548 = vand.u32 2147483647, %v340
          %vm549 = vcmp.eq.f32.partialorder %v548, 8.507059e+37
          %v550 = vand.u32 %v340, 2147483648
          %v551 = vor.u32 1.1754944e-38, %v550
          %v552 = vsel %vm549, %v551, %v547
          %v553 = vmul.f32 1.0, %v552
          %v554 = vrcp.pop %v531
          %v555 = vmul.f32 %v531, %v554
          %v556 = vsub.f32 1.0, %v555
          %v557 = vmul.f32 %v554, %v556
          %v558 = vadd.f32 %v554, %v557
          %vm559 = vweird.f32 %v531
          %vm560 = vweird.f32 %v554
          %vm561 = vmor %vm559, %vm560
          %v562 = vsel %vm561, %v554, %v558
          %v563 = vand.u32 2147483647, %v531
          %vm564 = vcmp.eq.f32.partialorder %v563, 8.507059e+37
          %v565 = vand.u32 %v531, 2147483648
          %v566 = vor.u32 1.1754944e-38, %v565
          %v567 = vsel %vm564, %v566, %v562
          %v568 = vmul.f32 1.0, %v567
          %v569 = vadd.f32 %v553, %v568
          %v570 = vrcp.pop %v532
          %v571 = vmul.f32 %v532, %v570
          %v572 = vsub.f32 1.0, %v571
          %v573 = vmul.f32 %v570, %v572
          %v574 = vadd.f32 %v570, %v573
          %vm575 = vweird.f32 %v532
          %vm576 = vweird.f32 %v570
          %vm577 = vmor %vm575, %vm576
          %v578 = vsel %vm577, %v570, %v574
          %v579 = vand.u32 2147483647, %v532
          %vm580 = vcmp.eq.f32.partialorder %v579, 8.507059e+37
          %v581 = vand.u32 %v532, 2147483648
          %v582 = vor.u32 1.1754944e-38, %v581
          %v583 = vsel %vm580, %v582, %v578
          %v584 = vmul.f32 1.0, %v583
          %v585 = vadd.f32 %v569, %v584
          %v586 = vrcp.pop %v533
          %v587 = vmul.f32 %v533, %v586
          %v588 = vsub.f32 1.0, %v587
          %v589 = vmul.f32 %v586, %v588
          %v590 = vadd.f32 %v586, %v589
          %vm591 = vweird.f32 %v533
          %vm592 = vweird.f32 %v586
          %vm593 = vmor %vm591, %vm592
          %v594 = vsel %vm593, %v586, %v590
          %v595 = vand.u32 2147483647, %v533
          %vm596 = vcmp.eq.f32.partialorder %v595, 8.507059e+37
          %v597 = vand.u32 %v533, 2147483648
          %v598 = vor.u32 1.1754944e-38, %v597
          %v599 = vsel %vm596, %v598, %v594
          %v600 = vmul.f32 1.0, %v599
          %v601 = vadd.f32 %v585, %v600
          %v602 = vrcp.pop %v534
          %v603 = vmul.f32 %v534, %v602
          %v604 = vsub.f32 1.0, %v603
          %v605 = vmul.f32 %v602, %v604
          %v606 = vadd.f32 %v602, %v605
          %vm607 = vweird.f32 %v534
          %vm608 = vweird.f32 %v602
          %vm609 = vmor %vm607, %vm608
          %v610 = vsel %vm609, %v602, %v606
          %v611 = vand.u32 2147483647, %v534
          %vm612 = vcmp.eq.f32.partialorder %v611, 8.507059e+37
          %v613 = vand.u32 %v534, 2147483648
          %v614 = vor.u32 1.1754944e-38, %v613
          %v615 = vsel %vm612, %v614, %v610
          %v616 = vmul.f32 1.0, %v615
          %v617 = vadd.f32 %v601, %v616
          %v618 = vrcp.pop %v535
          %v619 = vmul.f32 %v535, %v618
          %v620 = vsub.f32 1.0, %v619
          %v621 = vmul.f32 %v618, %v620
          %v622 = vadd.f32 %v618, %v621
          %vm623 = vweird.f32 %v535
          %vm624 = vweird.f32 %v618
          %vm625 = vmor %vm623, %vm624
          %v626 = vsel %vm625, %v618, %v622
          %v627 = vand.u32 2147483647, %v535
          %vm628 = vcmp.eq.f32.partialorder %v627, 8.507059e+37
          %v629 = vand.u32 %v535, 2147483648
          %v630 = vor.u32 1.1754944e-38, %v629
          %v631 = vsel %vm628, %v630, %v626
          %v632 = vmul.f32 1.0, %v631
          %v633 = vadd.f32 %v617, %v632
          %v634 = vrcp.pop %v536
          %v635 = vmul.f32 %v536, %v634
          %v636 = vsub.f32 1.0, %v635
          %v637 = vmul.f32 %v634, %v636
          %v638 = vadd.f32 %v634, %v637
          %vm639 = vweird.f32 %v536
          %vm640 = vweird.f32 %v634
          %vm641 = vmor %vm639, %vm640
          %v642 = vsel %vm641, %v634, %v638
          %v643 = vand.u32 2147483647, %v536
          %vm644 = vcmp.eq.f32.partialorder %v643, 8.507059e+37
          %v645 = vand.u32 %v536, 2147483648
          %v646 = vor.u32 1.1754944e-38, %v645
          %v647 = vsel %vm644, %v646, %v642
          %v648 = vmul.f32 1.0, %v647
          %v649 = vadd.f32 %v633, %v648
          %v650 = vrcp.pop %v537
          %v651 = vmul.f32 %v537, %v650
          %v652 = vsub.f32 1.0, %v651
          %v653 = vmul.f32 %v650, %v652
          %v654 = vadd.f32 %v650, %v653
          %vm655 = vweird.f32 %v537
          %vm656 = vweird.f32 %v650
          %vm657 = vmor %vm655, %vm656
          %v658 = vsel %vm657, %v650, %v654
          %v659 = vand.u32 2147483647, %v537
          %vm660 = vcmp.eq.f32.partialorder %v659, 8.507059e+37
          %v661 = vand.u32 %v537, 2147483648
          %v662 = vor.u32 1.1754944e-38, %v661
          %v663 = vsel %vm660, %v662, %v658
          %v664 = vmul.f32 1.0, %v663
          %v665 = vadd.f32 %v649, %v664
          %v666 = vmul.f32 %v340, %v531
          %v667 = vlog2.pop %v666
          %v668 = vmul.f32 %v667, 0.6931472
          %v669 = vmul.f32 %v532, %v533
          %v670 = vlog2.pop %v669
          %v671 = vmul.f32 %v670, 0.6931472
          %v672 = vadd.f32 %v668, %v671
          %v673 = vmul.f32 %v534, %v535
          %v674 = vlog2.pop %v673
          %v675 = vmul.f32 %v674, 0.6931472
          %v676 = vadd.f32 %v672, %v675
          %v677 = vmul.f32 %v536, %v537
          %v678 = vlog2.pop %v677
          %v679 = vmul.f32 %v678, 0.6931472
          %v680 = vadd.f32 %v676, %v679
          %v681 = vrcp.pop %v538
          %v682 = vmul.f32 %v538, %v681
          %v683 = vsub.f32 1.0, %v682
          %v684 = vmul.f32 %v681, %v683
          %v685 = vadd.f32 %v681, %v684
          %vm686 = vweird.f32 %v538
          %vm687 = vweird.f32 %v681
          %vm688 = vmor %vm686, %vm687
          %v689 = vsel %vm688, %v681, %v685
          %v690 = vand.u32 2147483647, %v538
          %vm691 = vcmp.eq.f32.partialorder %v690, 8.507059e+37
          %v692 = vand.u32 %v538, 2147483648
          %v693 = vor.u32 1.1754944e-38, %v692
          %v694 = vsel %vm691, %v693, %v689
          %v695 = vmul.f32 1.0, %v694
          %v696 = vmul.f32 %v695, %v695
          %v697 = vlog2.pop %v538
          %v698 = vmul.f32 %v697, 0.6931472
          %v699 = vmul.f32 %v696, -0.0005952381
          %v700 = vadd.f32 %v699, 0.0007936508
          %v701 = vmul.f32 %v696, %v700
          %v702 = vadd.f32 %v701, -0.0027777778
          %v703 = vmul.f32 %v696, %v702
          %v704 = vadd.f32 %v703, 0.083333336
          %v705 = vmul.f32 %v695, %v704
          %v706 = vsub.f32 %v538, 0.5
          %v707 = vmul.f32 %v706, %v698
          %v708 = vsub.f32 %v707, %v538
          %v709 = vadd.f32 %v708, 0.9189385
          %v710 = vadd.f32 %v709, %v705
          %v711 = vsub.f32 %v710, %v680
          %v712 = vmul.f32 %v696, 0.003968254
          %v713 = vsub.f32 0.008333334, %v712
          %v714 = vmul.f32 %v696, %v713
          %v715 = vsub.f32 0.083333336, %v714
          %v716 = vmul.f32 %v696, %v715
          %v717 = vmul.f32 %v695, 0.5
          %v718 = vsub.f32 %v698, %v717
          %v719 = vsub.f32 %v718, %v716
          %v720 = vsub.f32 %v719, %v665
          %v721 = vsel %vm316, %v521, 0.0
          %v722 = vrot.slane %v721, 4
          %v723 = vadd.f32 %v721, %v722
          %v724 = vrot.slane %v723, 2
          %v725 = vadd.f32 %v723, %v724
          %v726 = vrot.slane %v725, 1
          %v727 = vadd.f32 %v725, %v726
          %v728 = vsub.f32 %v727, %v711
          %v729 = vsub.f32 %v333, 1.0
          %v730 = vsub.f32 %v530, %v720
          %v731 = vmul.f32 %v729, %v730
          %v732 = vsel %vm316, %v731, 0.0
          %v733 = vrot.slane %v732, 4
          %v734 = vadd.f32 %v732, %v733
          %v735 = vrot.slane %v734, 2
          %v736 = vadd.f32 %v734, %v735
          %v737 = vrot.slane %v736, 1
          %v738 = vadd.f32 %v736, %v737
          %v739 = vsub.f32 %v728, %v738
          %vm740 = vcmask 8192
          %741 = vst.msk [vmem:[#allocation6] sm:$0x1] %vm740, %v739
        $region44: #{tpu_custom_call.1} parent=31 // pred_fallthru
          _
        // Predicated region
        $region45: #{tpu_custom_call.1} parent=31 // pred_check
          %p742 = pneg %p123
        $region46: #{tpu_custom_call.1} parent=31 // pred_check_branch
          %744 = sbr.rel (%p742) target = $region48
        $region47: #{tpu_custom_call.1} parent=31 // pred_region
          %746 = vsyncadd [#allocation5], 0
          %s747 = scalar_lea.hbm %s3, %s22
          %s749 = sshll.u32 [#allocation6], 4
          %s750 = int_to_ptr.vmem [resolvable:$true] %s749
          %s751 = sshll.u32 %s747, 4
          %s752 = int_to_ptr.hbm [resolvable:$true] %s751
          %754 = dma.vmem_to_hbm [thread:$0]  %s750, 16, %s752, [#allocation5]
        $region48: #{tpu_custom_call.1} parent=31 // pred_fallthru
          _
        // Predicated region
        $region49: #{tpu_custom_call.1} parent=31 // pred_check
          %p755 = pneg %p123
        $region50: #{tpu_custom_call.1} parent=31 // pred_check_branch
          %757 = sbr.rel (%p755) target = $region52
        $region51: #{tpu_custom_call.1} parent=31 // pred_region
          %759 = dma.done [#allocation5], 16
        $region52: #{tpu_custom_call.1} parent=31 // pred_fallthru
          _
      $region32: #{tpu_custom_call.1} parent=5 // pred_fallthru
        _
      %p760 = scmp.le.s32.totalorder 2, %s13
      // Predicated region
      $region53: #{tpu_custom_call.1} parent=5 // pred_check
        %p761 = pneg %p760
      $region54: #{tpu_custom_call.1} parent=5 // pred_check_branch
        %763 = sbr.rel (%p761) target = $region56
      $region55: #{tpu_custom_call.1} parent=5 // pred_region
        %s764 = ssub.s32 %s13, 2
      $region56: #{tpu_custom_call.1} parent=5 // pred_fallthru
        _
    $region6: #{tpu_custom_call.1} parent=1 // loop_footer
      %s17 = sadd.s32 1, %s13
    $region7: #{tpu_custom_call.1} parent=1 // loop_footer_branch
      %12 = sbr.rel target = $region3
    $region8: #{tpu_custom_call.1} parent=1 // loop_exit
      _
    %765 = vsyncpa [#allocation4], 1
    %s766 = scalar_lea.sflag [#allocation4], 1
    %767 = vsyncpa %s766, 1
    %768 = vsyncpa [#allocation5], 1
    %s769 = scalar_lea.sflag [#allocation5], 1
    %770 = vsyncpa %s769, 1

</llo_original>
